<compile_context>
chip_gen: v5e
topology: v5e:2x2
jax: 0.10.0
libtpu: 0.0.40
codegen_flags: <defaults>
</compile_context>

<pallas_src>
import functools

import numpy as np
import jax
import jax.numpy as jnp
from jax.experimental import pallas as pl
from jax.experimental.pallas import tpu as pltpu


# ------------------------------ kernel helpers --------------------------------

def _pow_int(x, n):
    """x**n for integer n >= 1 via binary exponentiation (VPU multiplies only)."""
    acc = None
    base = x
    while n:
        if n & 1:
            acc = base if acc is None else acc * base
        n >>= 1
        if n:
            base = base * base
    return acc


def _clamp_pow_static(x, p, eps):
    """clamp(x, eps) ** p with p baked in at trace time."""
    xc = jnp.maximum(x, eps)
    if float(p).is_integer() and 1.0 <= p <= 16.0:
        return _pow_int(xc, int(p))          # default p=3: two VPU muls, no EUP
    return jnp.exp(p * jnp.log(xc))          # general static p


def _inv_pow_static(m, p):
    """m ** (1/p) with p baked in; applied only to the pooled (k-times-smaller) output."""
    if p == 1.0:
        return m
    if p == 2.0:
        return jnp.sqrt(m)
    if p == 4.0:
        return jnp.sqrt(jnp.sqrt(m))
    return jnp.exp(jnp.log(m) * (1.0 / p))


# --------------------------------- kernels --------------------------------------

def _gem_kernel_static(x_ref, pool_ref, o_ref, *, p, eps):
    # x_ref: (1, TC, TL)  pool_ref: (TL, TLout)  o_ref: (1, TC, TLout)
    xp = _clamp_pow_static(x_ref[0], p, eps)                       # VPU
    mean = jnp.dot(xp, pool_ref[...],                              # MXU window average
                   preferred_element_type=jnp.float32)
    o_ref[0] = _inv_pow_static(mean, p)                            # EUP on pooled vals only


def _gem_kernel_dynamic(p_ref, x_ref, pool_ref, o_ref, *, eps):
    # p_ref: (1,) f32 scalar-prefetch operand in SMEM (learnable GeM exponent).
    p = p_ref[0]
    xc = jnp.maximum(x_ref[0], eps)
    xp = jnp.exp(p * jnp.log(xc))
    mean = jnp.dot(xp, pool_ref[...], preferred_element_type=jnp.float32)
    o_ref[0] = jnp.exp(jnp.log(mean) * (1.0 / p))


# --------------------------------- wrapper ---------------------------------------

def _largest_tile(full, quantum, limit):
    """Largest multiple of `quantum` that divides `full` and is <= `limit`;
    falls back to `full` (a full-extent block is always a legal block shape)."""
    if full <= limit:
        return full
    t = (limit // quantum) * quantum
    while t >= quantum:
        if full % t == 0:
            return t
        t -= quantum
    return full


def gem_pool1d(x, kernel_size=8, p=3.0, eps=1e-6):
    """GeM pooling: avg_pool1d(clamp(x, eps)^p, kernel_size)^(1/p).

    x: (B, C, L) float (PyTorch NCL layout).  Returns (B, C, L // kernel_size) f32.
    `p` may be a Python number (baked into the kernel; module default 3.0) or a
    jax array of shape ()/(1,) (runtime / learnable parameter path).
    """
    x = x.astype(jnp.float32)                 # autocast(enabled=False) => f32 compute
    B, C, L = x.shape
    k = int(kernel_size)
    Lout = L // k
    if Lout < 1:
        raise ValueError("sequence length must be >= kernel_size")
    L_eff = Lout * k
    if L_eff != L:                            # avg_pool1d (stride=k) drops the remainder
        x = x[:, :, :L_eff]

    # Tile choice: TL a multiple of 128*k (so both TL and TLout are lane-dense when
    # tiled), TC a multiple of 8; cap sizes so double-buffered in/out blocks plus the
    # pooling matrix stay far below every generation's scoped-VMEM default (v7x: 64 MiB
    # physical / 32 MiB scoped).
    TL = _largest_tile(L_eff, 128 * k, 2048)
    TLout = TL // k
    tc_limit = max(8, (1 << 20) // (TL * 4))  # ~<= 1 MiB activation block
    TC = _largest_tile(C, 8, tc_limit)

    # Constant block-averaging matrix: pool[i, j] = 1/k iff lane i belongs to window j.
    pool = (jnp.arange(TL, dtype=jnp.int32)[:, None] // k
            == jnp.arange(TLout, dtype=jnp.int32)[None, :]).astype(jnp.float32) * (1.0 / k)

    grid = (B, C // TC, L_eff // TL)
    x_spec = pl.BlockSpec((1, TC, TL), lambda b, ci, li, *_: (b, ci, li))
    pool_spec = pl.BlockSpec((TL, TLout), lambda b, ci, li, *_: (0, 0))
    out_spec = pl.BlockSpec((1, TC, TLout), lambda b, ci, li, *_: (b, ci, li))
    out_shape = jax.ShapeDtypeStruct((B, C, Lout), jnp.float32)
    cparams = pltpu.CompilerParams(
        dimension_semantics=("parallel", "parallel", "parallel"))

    if isinstance(p, (int, float, np.integer, np.floating)):
        # Statically-known p (the module's nn.Parameter default of 3.0).
        return pl.pallas_call(
            functools.partial(_gem_kernel_static, p=float(p), eps=float(eps)),
            out_shape=out_shape,
            grid=grid,
            in_specs=[x_spec, pool_spec],
            out_specs=out_spec,
            compiler_params=cparams,
        )(x, pool)

    # Runtime (learnable) p: SMEM scalar-prefetch path.
    p_arr = jnp.asarray(p, jnp.float32).reshape(1)
    grid_spec = pltpu.PrefetchScalarGridSpec(
        num_scalar_prefetch=1,
        grid=grid,
        in_specs=[x_spec, pool_spec],
        out_specs=out_spec,
    )
    return pl.pallas_call(
        functools.partial(_gem_kernel_dynamic, eps=float(eps)),
        out_shape=out_shape,
        grid_spec=grid_spec,
        compiler_params=cparams,
    )(p_arr, x, pool)


# --------------------------------- reference -------------------------------------

def gem_reference(x, kernel_size, p, eps):
    """Pure-jnp reference of F.avg_pool1d(x.clamp(min=eps)**p, k)**(1/p)."""
    x = x.astype(jnp.float32)
    B, C, L = x.shape
    k = int(kernel_size)
    Lout = L // k
    xc = jnp.maximum(x[:, :, :Lout * k], eps)
    m = jnp.mean((xc ** p).reshape(B, C, Lout, k), axis=-1)
    return m ** (1.0 / p)


# ----------------------------------- main -----------------------------------------

if __name__ == "__main__":
    key = jax.random.PRNGKey(0)
    B, C, L, k = 2, 64, 1030, 8   # L % k != 0: trailing samples dropped, matching avg_pool1d
    x = jax.random.normal(key, (B, C, L), jnp.float32)

    # 1) static-p path (module default: p = 3.0, eps = 1e-6).
    fwd = jax.jit(functools.partial(gem_pool1d, kernel_size=k, p=3.0, eps=1e-6))
    out = jax.block_until_ready(fwd(x))
    assert out.shape == (B, C, L // k)
    np.testing.assert_allclose(np.asarray(out),
                               np.asarray(gem_reference(x, k, 3.0, 1e-6)),
                               rtol=5e-3, atol=1e-7)

    # 2) dynamic-p path (p passed as a learnable-parameter tensor).
    p_param = jnp.full((1,), 2.5, jnp.float32)
    fwd_dyn = jax.jit(lambda xx, pp: gem_pool1d(xx, kernel_size=k, p=pp, eps=1e-6))
    out_dyn = jax.block_until_ready(fwd_dyn(x, p_param))
    assert out_dyn.shape == (B, C, L // k)
    np.testing.assert_allclose(np.asarray(out_dyn),
                               np.asarray(gem_reference(x, k, 2.5, 1e-6)),
                               rtol=5e-3, atol=1e-7)

    print("KERNEL_OK")
</pallas_src>

<mosaic_0001>
module attributes {stable_mosaic.version = 11 : i64} {
  func.func @_gem_kernel_static(%arg0: i32, %arg1: i32, %arg2: i32, %arg3: memref<1x64x1024xf32, #tpu.memory_space<vmem>>, %arg4: memref<1024x128xf32, #tpu.memory_space<vmem>>, %arg5: memref<1x64x128xf32, #tpu.memory_space<vmem>>) attributes {dimension_semantics = [#tpu.dimension_semantics<parallel>, #tpu.dimension_semantics<parallel>, #tpu.dimension_semantics<parallel>], iteration_bounds = array<i64: 2, 1, 1>, scalar_prefetch = 0 : i64, scratch_operands = 0 : i64, tpu.core_type = #tpu.core_type<tc>, window_params = [{transform_indices = @transform_0, window_bounds = array<i64: 1, 64, 1024>}, {pipeline_mode = #tpu.pipeline_mode<synchronous>, transform_indices = @transform_1, window_bounds = array<i64: 1024, 128>}, {transform_indices = @transform_2, window_bounds = array<i64: 1, 64, 128>}]} {
    %c0 = arith.constant 0 : index
    %c0_0 = arith.constant 0 : index
    %c0_1 = arith.constant 0 : index
    %0 = vector.load %arg3[%c0, %c0_0, %c0_1] : memref<1x64x1024xf32, #tpu.memory_space<vmem>>, vector<1x64x1024xf32>
    %1 = vector.shape_cast %0 : vector<1x64x1024xf32> to vector<64x1024xf32>
    %cst = arith.constant 9.99999997E-7 : f32
    %2 = vector.broadcast %cst : f32 to vector<64x1024xf32>
    %3 = arith.maximumf %1, %2 : vector<64x1024xf32>
    %4 = arith.mulf %3, %3 : vector<64x1024xf32>
    %5 = arith.mulf %3, %4 : vector<64x1024xf32>
    %c0_2 = arith.constant 0 : index
    %c0_3 = arith.constant 0 : index
    %6 = vector.load %arg4[%c0_2, %c0_3] : memref<1024x128xf32, #tpu.memory_space<vmem>>, vector<1024x128xf32>
    %cst_4 = arith.constant dense<0.000000e+00> : vector<64x128xf32>
    %7 = tpu.matmul %5, %6, %cst_4 {dimension_numbers = #tpu.dot_dimension_numbers<[1], [0], [0], [1], [0, 0, 1, 1], [], []>} : vector<64x1024xf32>, vector<1024x128xf32>, vector<64x128xf32> -> vector<64x128xf32>
    %8 = math.log %7 : vector<64x128xf32>
    %cst_5 = arith.constant 0.333333343 : f32
    %9 = vector.broadcast %cst_5 : f32 to vector<64x128xf32>
    %10 = arith.mulf %8, %9 : vector<64x128xf32>
    %11 = math.exp %10 : vector<64x128xf32>
    %c0_6 = arith.constant 0 : index
    %c0_7 = arith.constant 0 : index
    %c0_8 = arith.constant 0 : index
    %12 = vector.load %arg5[%c0_6, %c0_7, %c0_8] : memref<1x64x128xf32, #tpu.memory_space<vmem>>, vector<1x64x128xf32>
    %13 = vector.shape_cast %12 : vector<1x64x128xf32> to vector<64x128xf32>
    %14 = vector.shape_cast %11 : vector<64x128xf32> to vector<1x64x128xf32>
    tpu.vector_store %arg5[%c0_6, %c0_7, %c0_8], %14 {strides = array<i32>} : memref<1x64x128xf32, #tpu.memory_space<vmem>>, vector<1x64x128xf32>,
    return
  }
  func.func @transform_0(%arg0: i32, %arg1: i32, %arg2: i32) -> (i32, i32, i32) {
    %c0_i32 = arith.constant 0 : i32
    return %arg0, %arg1, %arg2 : i32, i32, i32
  }
  func.func @transform_1(%arg0: i32, %arg1: i32, %arg2: i32) -> (i32, i32) {
    %c0_i32 = arith.constant 0 : i32
    %c0_i32_0 = arith.constant 0 : i32
    %c0_i32_1 = arith.constant 0 : i32
    return %c0_i32, %c0_i32_0 : i32, i32
  }
  func.func @transform_2(%arg0: i32, %arg1: i32, %arg2: i32) -> (i32, i32, i32) {
    %c0_i32 = arith.constant 0 : i32
    return %arg0, %arg1, %arg2 : i32, i32, i32
  }
}

</mosaic_0001>

<llo_original>
// kernel: gem_pool1d.1
$region0: #{gem_pool1d.1}
  #allocation0 [shape = 'u32[]', space=smem, size = 0x4, offset = 0x4, fixed_abs, tag = 'smem constant byte address 0x4 - core index']
  #allocation1 [shape = 'u32[72,128]{1,0:T(1,128)}', space=vmem, size = 0x9000, scoped, tag = 'internal scratch']
  %s0 = inlined_call_operand.vmem [shape: f32[2,64,1024], index: 0, kind: input, shape index: {}]
  %s1 = inlined_call_operand.vmem [shape: f32[1024,128], index: 1, kind: input, shape index: {}]
  %s2 = inlined_call_operand.hbm [shape: f32[2,64,128], index: 2, kind: output, shape index: {}]
  %s3 = sld [smem:[#allocation0]]
  $region41: #{gem_pool1d.1} parent=0
    _
  %s5 = ssub.s32 1, %s3
  %s6 = scalar_select 0, %s5, %s3
  $region1: #{gem_pool1d.1} parent=0
    #allocation2 [shape = 'u8[65536]{0}', space=vmem, size = 0x10000, scoped, tag = 'output window, operand 0']
    #allocation3 [shape = 's32[2]{0}', space=sflag, size = 0x8, scoped, tag = 'scoped memory for gem_pool1d.1']
    %7 = vsyncpa [#allocation3], 0
    %s8 = scalar_lea.sflag [#allocation3], 1
    %9 = vsyncpa %s8, 0
    loop: start=0, step=1, limit=4
    $region2: #{gem_pool1d.1} parent=1 // loop_pre_header
      _
    $region3: #{gem_pool1d.1} parent=1 // loop_header
      %s11 = sphi 0, %s15
      %p12 = scmp.ge.s32.totalorder %s11, 4
      %s18 = sphi 0, %s37
      %s19 = sphi 0, %s33
      %s20 = sphi 0, %s29
      %s21 = sphi 0, %s18
      %s22 = sphi 0, %s19
      %s23 = sphi 0, %s20
      %s24 = sphi 0, %s21
      %s25 = sphi 0, %s22
      %s26 = sphi 0, %s23
      %s44 = sphi 0, %s46
      %s47 = sphi 0, %s44
      %s48 = sphi 0, %s47
      %s64 = sphi 0, %s48
      %s68 = sphi 0, %s68
      %s70 = sphi 0, %s68
      %s71 = sphi 0, %s70
      %s85 = sphi 0, %s71
      %s95 = sphi 0, %s97
      %s98 = sphi 0, %s95
      %s99 = sphi 0, %s98
      %s115 = sphi 0, %s99
    $region4: #{gem_pool1d.1} parent=1 // loop_header_branch
      %14 = sbr.rel (%p12) target = $region8
    $region5: #{gem_pool1d.1} parent=1 // loop_body
      %s16 = ssub.s32 %s11, 1
      %s17 = ssub.s32 %s11, 2
      %s27 = sadd.s32 1, %s20
      %p28 = scmp.ge.s32.totalorder %s27, 1
      %s29 = scalar_select %p28, 0, %s27
      %s30 = sadd.s32 1, %s19
      %s31 = scalar_select %p28, %s30, %s19
      %p32 = scmp.ge.s32.totalorder %s31, 1
      %s33 = scalar_select %p32, 0, %s31
      %s34 = sadd.s32 1, %s18
      %s35 = scalar_select %p32, %s34, %s18
      %p36 = scmp.ge.s32.totalorder %s35, 2
      %s37 = scalar_select %p36, 0, %s35
      %s38 = ssub.s32 %s18, %s37
      %s39 = ssub.s32 %s19, %s33
      %s40 = sor.u32 %s38, %s39
      %s41 = ssub.s32 %s20, %s29
      %s42 = sor.u32 %s40, %s41
      %p43 = scmp.eq.s32.totalorder %s42, 0
      %s45 = sadd.s32 %s44, 1
      %s46 = scalar_select %p43, %s44, %s45
      %p49 = pneg %p43
      %p50 = scmp.eq.s32.totalorder %s11, 1
      %p51 = por %p49, %p50
      %p52 = scmp.ne.s32.totalorder %s44, %s47
      %p53 = scmp.eq.s32.totalorder %s11, 0
      %p54 = por %p52, %p53
      %p55 = scmp.ne.s32.totalorder %s44, %s47
      %p56 = scmp.eq.s32.totalorder %s16, 1
      %p57 = por %p55, %p56
      %p58 = scmp.ne.s32.totalorder %s47, %s48
      %p59 = scmp.eq.s32.totalorder %s16, 0
      %p60 = por %p58, %p59
      %p61 = scmp.ne.s32.totalorder %s47, %s48
      %p62 = scmp.eq.s32.totalorder %s17, 1
      %p63 = por %p61, %p62
      %p65 = scmp.ne.s32.totalorder %s48, %s64
      %p66 = scmp.eq.s32.totalorder %s17, 0
      %p67 = por %p65, %p66
      %s69 = sadd.s32 %s68, 1
      %p72 = scmp.eq.s32.totalorder %s11, 1
      %p73 = scmp.ne.s32.totalorder %s68, %s70
      %p74 = scmp.eq.s32.totalorder %s11, 0
      %p75 = por %p73, %p74
      %p76 = scmp.ne.s32.totalorder %s68, %s70
      %p77 = scmp.eq.s32.totalorder %s16, 1
      %p78 = por %p76, %p77
      %p79 = scmp.ne.s32.totalorder %s70, %s71
      %p80 = scmp.eq.s32.totalorder %s16, 0
      %p81 = por %p79, %p80
      %p82 = scmp.ne.s32.totalorder %s70, %s71
      %p83 = scmp.eq.s32.totalorder %s17, 1
      %p84 = por %p82, %p83
      %p86 = scmp.ne.s32.totalorder %s71, %s85
      %p87 = scmp.eq.s32.totalorder %s17, 0
      %p88 = por %p86, %p87
      %s89 = ssub.s32 %s18, %s37
      %s90 = ssub.s32 %s19, %s33
      %s91 = sor.u32 %s89, %s90
      %s92 = ssub.s32 %s20, %s29
      %s93 = sor.u32 %s91, %s92
      %p94 = scmp.eq.s32.totalorder %s93, 0
      %s96 = sadd.s32 %s95, 1
      %s97 = scalar_select %p94, %s95, %s96
      %p100 = pneg %p94
      %p101 = scmp.eq.s32.totalorder %s11, 1
      %p102 = por %p100, %p101
      %p103 = scmp.ne.s32.totalorder %s95, %s98
      %p104 = scmp.eq.s32.totalorder %s11, 0
      %p105 = por %p103, %p104
      %p106 = scmp.ne.s32.totalorder %s95, %s98
      %p107 = scmp.eq.s32.totalorder %s16, 1
      %p108 = por %p106, %p107
      %p109 = scmp.ne.s32.totalorder %s98, %s99
      %p110 = scmp.eq.s32.totalorder %s16, 0
      %p111 = por %p109, %p110
      %p112 = scmp.ne.s32.totalorder %s98, %s99
      %p113 = scmp.eq.s32.totalorder %s17, 1
      %p114 = por %p112, %p113
      %p116 = scmp.ne.s32.totalorder %s99, %s115
      %p117 = scmp.eq.s32.totalorder %s17, 0
      %p118 = por %p116, %p117
      %p119 = scmp.le.s32.totalorder 1, %s11
      %p120 = scmp.lt.s32.totalorder %s11, 3
      %p121 = pnand %p119, %p120
      %p122 = pneg %p121
      // Predicated region
      $region9: #{gem_pool1d.1} parent=5 // pred_check
        _
      $region10: #{gem_pool1d.1} parent=5 // pred_check_branch
        %124 = sbr.rel (%p121) target = $region12
      $region11: #{gem_pool1d.1} parent=5 // pred_region
        %s125 = ssub.s32 %s11, 1
        // Predicated region
        $region13: #{gem_pool1d.1} parent=11 // pred_check
          %p126 = pneg %p81
        $region14: #{gem_pool1d.1} parent=11 // pred_check_branch
          %128 = sbr.rel (%p126) target = $region16
        $region15: #{gem_pool1d.1} parent=11 // pred_region
          _
        $region16: #{gem_pool1d.1} parent=11 // pred_fallthru
          _
      $region12: #{gem_pool1d.1} parent=5 // pred_fallthru
        _
      %p129 = scmp.lt.s32.totalorder %s11, 2
      // Predicated region
      $region17: #{gem_pool1d.1} parent=5 // pred_check
        %p130 = pneg %p129
      $region18: #{gem_pool1d.1} parent=5 // pred_check_branch
        %132 = sbr.rel (%p130) target = $region20
      $region19: #{gem_pool1d.1} parent=5 // pred_region
        // Predicated region
        $region21: #{gem_pool1d.1} parent=19 // pred_check
          %p133 = pneg %p54
        $region22: #{gem_pool1d.1} parent=19 // pred_check_branch
          %135 = sbr.rel (%p133) target = $region24
        $region23: #{gem_pool1d.1} parent=19 // pred_region
          %s136 = smul.u32 8, %s19
          %s137 = smul.u32 8, %s20
          %p138 = scmp.lt.s32.totalorder %s18, 1
          %s139 = scalar_select %p138, %s18, 1
          %p140 = scmp.lt.s32.totalorder %s136, 7
          %s141 = scalar_select %p140, %s136, 7
          %p142 = scmp.lt.s32.totalorder %s137, 7
          %s143 = scalar_select %p142, %s137, 7
          %s144 = smul.addr %s141, 8
          %s145 = sadd.s32 %s143, %s144
          %s146 = smul.addr %s139, 64
          %s147 = sadd.s32 %s145, %s146
          %s148 = smul.addr %s147, 8
          %s149 = scalar_lea.vmem %s0, %s148
          %s150 = smul.u32 8, %s19
          %s151 = smul.u32 8, %s20
        $region24: #{gem_pool1d.1} parent=19 // pred_fallthru
          _
      $region20: #{gem_pool1d.1} parent=5 // pred_fallthru
        _
      %p152 = scmp.le.s32.totalorder 1, %s11
      %p153 = scmp.lt.s32.totalorder %s11, 3
      %p154 = pnand %p152, %p153
      %p155 = pneg %p154
      // Predicated region
      $region25: #{gem_pool1d.1} parent=5 // pred_check
        _
      $region26: #{gem_pool1d.1} parent=5 // pred_check_branch
        %157 = sbr.rel (%p154) target = $region28
      $region27: #{gem_pool1d.1} parent=5 // pred_region
        %s158 = ssub.s32 %s11, 1
        %s159 = smul.u32 8, %s22
        %s160 = smul.u32 8, %s23
        %p161 = scmp.lt.s32.totalorder %s21, 1
        %s162 = scalar_select %p161, %s21, 1
        %p163 = scmp.lt.s32.totalorder %s159, 7
        %s164 = scalar_select %p163, %s159, 7
        %p165 = scmp.lt.s32.totalorder %s160, 7
        %s166 = scalar_select %p165, %s160, 7
        %s167 = smul.addr %s164, 8
        %s168 = sadd.s32 %s166, %s167
        %s169 = smul.addr %s162, 64
        %s170 = sadd.s32 %s168, %s169
        %s171 = smul.addr %s170, 8
        %s172 = scalar_lea.vmem %s0, %s171
        %p173 = pneg %p60
        %p174 = pneg %p57
        %p175 = pneg %p81
        %p176 = pneg %p78
        %p177 = pneg %p111
        %p178 = pneg %p108
        %s179 = sand.u32 %s98, 1
        %s180 = scalar_lea.sflag [#allocation3], %s179
        %s181 = sand.u32 %s98, 1
        %s182 = smul.addr %s181, 64
        %s183 = scalar_lea.vmem [#allocation2], %s182
        %s184 = smul.u32 8, %s22
        %s185 = smul.u32 8, %s23
        %p186 = scmp.lt.s32.totalorder %s21, 1
        %s187 = scalar_select %p186, %s21, 1
        %p188 = scmp.lt.s32.totalorder %s184, 7
        %s189 = scalar_select %p188, %s184, 7
        %p190 = scmp.lt.s32.totalorder %s185, 7
        %s191 = scalar_select %p190, %s185, 7
        %s192 = smul.addr %s189, 8
        %s193 = sadd.s32 %s191, %s192
        %s194 = smul.addr %s187, 64
        %s195 = sadd.s32 %s193, %s194
        %s196 = smul.addr %s195, 8
        %s197 = scalar_lea.vmem %s0, %s196
        %s198 = smul.u32 8, %s22
        %s199 = smul.u32 8, %s23
        %s200 = smul.u32 8, %s22
        %v201 = vld [vmem:[%s197] sm:$0xff]
        %v202 = vld [vmem:[%s197 + $0x8] sm:$0xff]
        %v203 = vld [vmem:[%s197 + $0x10] sm:$0xff]
        %v204 = vld [vmem:[%s197 + $0x18] sm:$0xff]
        %v205 = vld [vmem:[%s197 + $0x20] sm:$0xff]
        %v206 = vld [vmem:[%s197 + $0x28] sm:$0xff]
        %v207 = vld [vmem:[%s197 + $0x30] sm:$0xff]
        %v208 = vld [vmem:[%s197 + $0x38] sm:$0xff]
        %v209 = vld [vmem:[%s197 + $0x40] sm:$0xff]
        %v210 = vld [vmem:[%s197 + $0x48] sm:$0xff]
        %v211 = vld [vmem:[%s197 + $0x50] sm:$0xff]
        %v212 = vld [vmem:[%s197 + $0x58] sm:$0xff]
        %v213 = vld [vmem:[%s197 + $0x60] sm:$0xff]
        %v214 = vld [vmem:[%s197 + $0x68] sm:$0xff]
        %v215 = vld [vmem:[%s197 + $0x70] sm:$0xff]
        %v216 = vld [vmem:[%s197 + $0x78] sm:$0xff]
        %v217 = vld [vmem:[%s197 + $0x80] sm:$0xff]
        %v218 = vld [vmem:[%s197 + $0x88] sm:$0xff]
        %v219 = vld [vmem:[%s197 + $0x90] sm:$0xff]
        %v220 = vld [vmem:[%s197 + $0x98] sm:$0xff]
        %v221 = vld [vmem:[%s197 + $0xa0] sm:$0xff]
        %v222 = vld [vmem:[%s197 + $0xa8] sm:$0xff]
        %v223 = vld [vmem:[%s197 + $0xb0] sm:$0xff]
        %v224 = vld [vmem:[%s197 + $0xb8] sm:$0xff]
        %v225 = vld [vmem:[%s197 + $0xc0] sm:$0xff]
        %v226 = vld [vmem:[%s197 + $0xc8] sm:$0xff]
        %v227 = vld [vmem:[%s197 + $0xd0] sm:$0xff]
        %v228 = vld [vmem:[%s197 + $0xd8] sm:$0xff]
        %v229 = vld [vmem:[%s197 + $0xe0] sm:$0xff]
        %v230 = vld [vmem:[%s197 + $0xe8] sm:$0xff]
        %v231 = vld [vmem:[%s197 + $0xf0] sm:$0xff]
        %v232 = vld [vmem:[%s197 + $0xf8] sm:$0xff]
        %v233 = vld [vmem:[%s197 + $0x100] sm:$0xff]
        %v234 = vld [vmem:[%s197 + $0x108] sm:$0xff]
        %v235 = vld [vmem:[%s197 + $0x110] sm:$0xff]
        %v236 = vld [vmem:[%s197 + $0x118] sm:$0xff]
        %v237 = vld [vmem:[%s197 + $0x120] sm:$0xff]
        %v238 = vld [vmem:[%s197 + $0x128] sm:$0xff]
        %v239 = vld [vmem:[%s197 + $0x130] sm:$0xff]
        %v240 = vld [vmem:[%s197 + $0x138] sm:$0xff]
        %v241 = vld [vmem:[%s197 + $0x140] sm:$0xff]
        %v242 = vld [vmem:[%s197 + $0x148] sm:$0xff]
        %v243 = vld [vmem:[%s197 + $0x150] sm:$0xff]
        %v244 = vld [vmem:[%s197 + $0x158] sm:$0xff]
        %v245 = vld [vmem:[%s197 + $0x160] sm:$0xff]
        %v246 = vld [vmem:[%s197 + $0x168] sm:$0xff]
        %v247 = vld [vmem:[%s197 + $0x170] sm:$0xff]
        %v248 = vld [vmem:[%s197 + $0x178] sm:$0xff]
        %v249 = vld [vmem:[%s197 + $0x180] sm:$0xff]
        %v250 = vld [vmem:[%s197 + $0x188] sm:$0xff]
        %v251 = vld [vmem:[%s197 + $0x190] sm:$0xff]
        %v252 = vld [vmem:[%s197 + $0x198] sm:$0xff]
        %v253 = vld [vmem:[%s197 + $0x1a0] sm:$0xff]
        %v254 = vld [vmem:[%s197 + $0x1a8] sm:$0xff]
        %v255 = vld [vmem:[%s197 + $0x1b0] sm:$0xff]
        %v256 = vld [vmem:[%s197 + $0x1b8] sm:$0xff]
        %v257 = vld [vmem:[%s197 + $0x1c0] sm:$0xff]
        %v258 = vld [vmem:[%s197 + $0x1c8] sm:$0xff]
        %v259 = vld [vmem:[%s197 + $0x1d0] sm:$0xff]
        %v260 = vld [vmem:[%s197 + $0x1d8] sm:$0xff]
        %v261 = vld [vmem:[%s197 + $0x1e0] sm:$0xff]
        %v262 = vld [vmem:[%s197 + $0x1e8] sm:$0xff]
        %v263 = vld [vmem:[%s197 + $0x1f0] sm:$0xff]
        %v264 = vld [vmem:[%s197 + $0x1f8] sm:$0xff]
        %v265 = vmax.f32 %v201, 1e-06
        %v266 = vmax.f32 %v202, 1e-06
        %v267 = vmax.f32 %v203, 1e-06
        %v268 = vmax.f32 %v204, 1e-06
        %v269 = vmax.f32 %v205, 1e-06
        %v270 = vmax.f32 %v206, 1e-06
        %v271 = vmax.f32 %v207, 1e-06
        %v272 = vmax.f32 %v208, 1e-06
        %v273 = vmax.f32 %v209, 1e-06
        %v274 = vmax.f32 %v210, 1e-06
        %v275 = vmax.f32 %v211, 1e-06
        %v276 = vmax.f32 %v212, 1e-06
        %v277 = vmax.f32 %v213, 1e-06
        %v278 = vmax.f32 %v214, 1e-06
        %v279 = vmax.f32 %v215, 1e-06
        %v280 = vmax.f32 %v216, 1e-06
        %v281 = vmax.f32 %v217, 1e-06
        %v282 = vmax.f32 %v218, 1e-06
        %v283 = vmax.f32 %v219, 1e-06
        %v284 = vmax.f32 %v220, 1e-06
        %v285 = vmax.f32 %v221, 1e-06
        %v286 = vmax.f32 %v222, 1e-06
        %v287 = vmax.f32 %v223, 1e-06
        %v288 = vmax.f32 %v224, 1e-06
        %v289 = vmax.f32 %v225, 1e-06
        %v290 = vmax.f32 %v226, 1e-06
        %v291 = vmax.f32 %v227, 1e-06
        %v292 = vmax.f32 %v228, 1e-06
        %v293 = vmax.f32 %v229, 1e-06
        %v294 = vmax.f32 %v230, 1e-06
        %v295 = vmax.f32 %v231, 1e-06
        %v296 = vmax.f32 %v232, 1e-06
        %v297 = vmax.f32 %v233, 1e-06
        %v298 = vmax.f32 %v234, 1e-06
        %v299 = vmax.f32 %v235, 1e-06
        %v300 = vmax.f32 %v236, 1e-06
        %v301 = vmax.f32 %v237, 1e-06
        %v302 = vmax.f32 %v238, 1e-06
        %v303 = vmax.f32 %v239, 1e-06
        %v304 = vmax.f32 %v240, 1e-06
        %v305 = vmax.f32 %v241, 1e-06
        %v306 = vmax.f32 %v242, 1e-06
        %v307 = vmax.f32 %v243, 1e-06
        %v308 = vmax.f32 %v244, 1e-06
        %v309 = vmax.f32 %v245, 1e-06
        %v310 = vmax.f32 %v246, 1e-06
        %v311 = vmax.f32 %v247, 1e-06
        %v312 = vmax.f32 %v248, 1e-06
        %v313 = vmax.f32 %v249, 1e-06
        %v314 = vmax.f32 %v250, 1e-06
        %v315 = vmax.f32 %v251, 1e-06
        %v316 = vmax.f32 %v252, 1e-06
        %v317 = vmax.f32 %v253, 1e-06
        %v318 = vmax.f32 %v254, 1e-06
        %v319 = vmax.f32 %v255, 1e-06
        %v320 = vmax.f32 %v256, 1e-06
        %v321 = vmax.f32 %v257, 1e-06
        %v322 = vmax.f32 %v258, 1e-06
        %v323 = vmax.f32 %v259, 1e-06
        %v324 = vmax.f32 %v260, 1e-06
        %v325 = vmax.f32 %v261, 1e-06
        %v326 = vmax.f32 %v262, 1e-06
        %v327 = vmax.f32 %v263, 1e-06
        %v328 = vmax.f32 %v264, 1e-06
        %v329 = vmul.f32 %v265, %v265
        %v330 = vmul.f32 %v266, %v266
        %v331 = vmul.f32 %v267, %v267
        %v332 = vmul.f32 %v268, %v268
        %v333 = vmul.f32 %v269, %v269
        %v334 = vmul.f32 %v270, %v270
        %v335 = vmul.f32 %v271, %v271
        %v336 = vmul.f32 %v272, %v272
        %v337 = vmul.f32 %v273, %v273
        %v338 = vmul.f32 %v274, %v274
        %v339 = vmul.f32 %v275, %v275
        %v340 = vmul.f32 %v276, %v276
        %v341 = vmul.f32 %v277, %v277
        %v342 = vmul.f32 %v278, %v278
        %v343 = vmul.f32 %v279, %v279
        %v344 = vmul.f32 %v280, %v280
        %v345 = vmul.f32 %v281, %v281
        %v346 = vmul.f32 %v282, %v282
        %v347 = vmul.f32 %v283, %v283
        %v348 = vmul.f32 %v284, %v284
        %v349 = vmul.f32 %v285, %v285
        %v350 = vmul.f32 %v286, %v286
        %v351 = vmul.f32 %v287, %v287
        %v352 = vmul.f32 %v288, %v288
        %v353 = vmul.f32 %v289, %v289
        %v354 = vmul.f32 %v290, %v290
        %v355 = vmul.f32 %v291, %v291
        %v356 = vmul.f32 %v292, %v292
        %v357 = vmul.f32 %v293, %v293
        %v358 = vmul.f32 %v294, %v294
        %v359 = vmul.f32 %v295, %v295
        %v360 = vmul.f32 %v296, %v296
        %v361 = vmul.f32 %v297, %v297
        %v362 = vmul.f32 %v298, %v298
        %v363 = vmul.f32 %v299, %v299
        %v364 = vmul.f32 %v300, %v300
        %v365 = vmul.f32 %v301, %v301
        %v366 = vmul.f32 %v302, %v302
        %v367 = vmul.f32 %v303, %v303
        %v368 = vmul.f32 %v304, %v304
        %v369 = vmul.f32 %v305, %v305
        %v370 = vmul.f32 %v306, %v306
        %v371 = vmul.f32 %v307, %v307
        %v372 = vmul.f32 %v308, %v308
        %v373 = vmul.f32 %v309, %v309
        %v374 = vmul.f32 %v310, %v310
        %v375 = vmul.f32 %v311, %v311
        %v376 = vmul.f32 %v312, %v312
        %v377 = vmul.f32 %v313, %v313
        %v378 = vmul.f32 %v314, %v314
        %v379 = vmul.f32 %v315, %v315
        %v380 = vmul.f32 %v316, %v316
        %v381 = vmul.f32 %v317, %v317
        %v382 = vmul.f32 %v318, %v318
        %v383 = vmul.f32 %v319, %v319
        %v384 = vmul.f32 %v320, %v320
        %v385 = vmul.f32 %v321, %v321
        %v386 = vmul.f32 %v322, %v322
        %v387 = vmul.f32 %v323, %v323
        %v388 = vmul.f32 %v324, %v324
        %v389 = vmul.f32 %v325, %v325
        %v390 = vmul.f32 %v326, %v326
        %v391 = vmul.f32 %v327, %v327
        %v392 = vmul.f32 %v328, %v328
        %v393 = vmul.f32 %v265, %v329
        %v394 = vmul.f32 %v266, %v330
        %v395 = vmul.f32 %v267, %v331
        %v396 = vmul.f32 %v268, %v332
        %v397 = vmul.f32 %v269, %v333
        %v398 = vmul.f32 %v270, %v334
        %v399 = vmul.f32 %v271, %v335
        %v400 = vmul.f32 %v272, %v336
        %v401 = vmul.f32 %v273, %v337
        %v402 = vmul.f32 %v274, %v338
        %v403 = vmul.f32 %v275, %v339
        %v404 = vmul.f32 %v276, %v340
        %v405 = vmul.f32 %v277, %v341
        %v406 = vmul.f32 %v278, %v342
        %v407 = vmul.f32 %v279, %v343
        %v408 = vmul.f32 %v280, %v344
        %v409 = vmul.f32 %v281, %v345
        %v410 = vmul.f32 %v282, %v346
        %v411 = vmul.f32 %v283, %v347
        %v412 = vmul.f32 %v284, %v348
        %v413 = vmul.f32 %v285, %v349
        %v414 = vmul.f32 %v286, %v350
        %v415 = vmul.f32 %v287, %v351
        %v416 = vmul.f32 %v288, %v352
        %v417 = vmul.f32 %v289, %v353
        %v418 = vmul.f32 %v290, %v354
        %v419 = vmul.f32 %v291, %v355
        %v420 = vmul.f32 %v292, %v356
        %v421 = vmul.f32 %v293, %v357
        %v422 = vmul.f32 %v294, %v358
        %v423 = vmul.f32 %v295, %v359
        %v424 = vmul.f32 %v296, %v360
        %v425 = vmul.f32 %v297, %v361
        %v426 = vmul.f32 %v298, %v362
        %v427 = vmul.f32 %v299, %v363
        %v428 = vmul.f32 %v300, %v364
        %v429 = vmul.f32 %v301, %v365
        %v430 = vmul.f32 %v302, %v366
        %v431 = vmul.f32 %v303, %v367
        %v432 = vmul.f32 %v304, %v368
        %v433 = vmul.f32 %v305, %v369
        %v434 = vmul.f32 %v306, %v370
        %v435 = vmul.f32 %v307, %v371
        %v436 = vmul.f32 %v308, %v372
        %v437 = vmul.f32 %v309, %v373
        %v438 = vmul.f32 %v310, %v374
        %v439 = vmul.f32 %v311, %v375
        %v440 = vmul.f32 %v312, %v376
        %v441 = vmul.f32 %v313, %v377
        %v442 = vmul.f32 %v314, %v378
        %v443 = vmul.f32 %v315, %v379
        %v444 = vmul.f32 %v316, %v380
        %v445 = vmul.f32 %v317, %v381
        %v446 = vmul.f32 %v318, %v382
        %v447 = vmul.f32 %v319, %v383
        %v448 = vmul.f32 %v320, %v384
        %v449 = vmul.f32 %v321, %v385
        %v450 = vmul.f32 %v322, %v386
        %v451 = vmul.f32 %v323, %v387
        %v452 = vmul.f32 %v324, %v388
        %v453 = vmul.f32 %v325, %v389
        %v454 = vmul.f32 %v326, %v390
        %v455 = vmul.f32 %v327, %v391
        %v456 = vmul.f32 %v328, %v392
        %v457 = vld [vmem:[%s1] sm:$0xff]
        %v458 = vld [vmem:[%s1 + $0x8] sm:$0xff]
        %v459 = vld [vmem:[%s1 + $0x10] sm:$0xff]
        %v460 = vld [vmem:[%s1 + $0x18] sm:$0xff]
        %v461 = vld [vmem:[%s1 + $0x20] sm:$0xff]
        %v462 = vld [vmem:[%s1 + $0x28] sm:$0xff]
        %v463 = vld [vmem:[%s1 + $0x30] sm:$0xff]
        %v464 = vld [vmem:[%s1 + $0x38] sm:$0xff]
        %v465 = vld [vmem:[%s1 + $0x40] sm:$0xff]
        %v466 = vld [vmem:[%s1 + $0x48] sm:$0xff]
        %v467 = vld [vmem:[%s1 + $0x50] sm:$0xff]
        %v468 = vld [vmem:[%s1 + $0x58] sm:$0xff]
        %v469 = vld [vmem:[%s1 + $0x60] sm:$0xff]
        %v470 = vld [vmem:[%s1 + $0x68] sm:$0xff]
        %v471 = vld [vmem:[%s1 + $0x70] sm:$0xff]
        %v472 = vld [vmem:[%s1 + $0x78] sm:$0xff]
        %v473 = vld [vmem:[%s1 + $0x80] sm:$0xff]
        %v474 = vld [vmem:[%s1 + $0x88] sm:$0xff]
        %v475 = vld [vmem:[%s1 + $0x90] sm:$0xff]
        %v476 = vld [vmem:[%s1 + $0x98] sm:$0xff]
        %v477 = vld [vmem:[%s1 + $0xa0] sm:$0xff]
        %v478 = vld [vmem:[%s1 + $0xa8] sm:$0xff]
        %v479 = vld [vmem:[%s1 + $0xb0] sm:$0xff]
        %v480 = vld [vmem:[%s1 + $0xb8] sm:$0xff]
        %v481 = vld [vmem:[%s1 + $0xc0] sm:$0xff]
        %v482 = vld [vmem:[%s1 + $0xc8] sm:$0xff]
        %v483 = vld [vmem:[%s1 + $0xd0] sm:$0xff]
        %v484 = vld [vmem:[%s1 + $0xd8] sm:$0xff]
        %v485 = vld [vmem:[%s1 + $0xe0] sm:$0xff]
        %v486 = vld [vmem:[%s1 + $0xe8] sm:$0xff]
        %v487 = vld [vmem:[%s1 + $0xf0] sm:$0xff]
        %v488 = vld [vmem:[%s1 + $0xf8] sm:$0xff]
        %v489 = vld [vmem:[%s1 + $0x100] sm:$0xff]
        %v490 = vld [vmem:[%s1 + $0x108] sm:$0xff]
        %v491 = vld [vmem:[%s1 + $0x110] sm:$0xff]
        %v492 = vld [vmem:[%s1 + $0x118] sm:$0xff]
        %v493 = vld [vmem:[%s1 + $0x120] sm:$0xff]
        %v494 = vld [vmem:[%s1 + $0x128] sm:$0xff]
        %v495 = vld [vmem:[%s1 + $0x130] sm:$0xff]
        %v496 = vld [vmem:[%s1 + $0x138] sm:$0xff]
        %v497 = vld [vmem:[%s1 + $0x140] sm:$0xff]
        %v498 = vld [vmem:[%s1 + $0x148] sm:$0xff]
        %v499 = vld [vmem:[%s1 + $0x150] sm:$0xff]
        %v500 = vld [vmem:[%s1 + $0x158] sm:$0xff]
        %v501 = vld [vmem:[%s1 + $0x160] sm:$0xff]
        %v502 = vld [vmem:[%s1 + $0x168] sm:$0xff]
        %v503 = vld [vmem:[%s1 + $0x170] sm:$0xff]
        %v504 = vld [vmem:[%s1 + $0x178] sm:$0xff]
        %v505 = vld [vmem:[%s1 + $0x180] sm:$0xff]
        %v506 = vld [vmem:[%s1 + $0x188] sm:$0xff]
        %v507 = vld [vmem:[%s1 + $0x190] sm:$0xff]
        %v508 = vld [vmem:[%s1 + $0x198] sm:$0xff]
        %v509 = vld [vmem:[%s1 + $0x1a0] sm:$0xff]
        %v510 = vld [vmem:[%s1 + $0x1a8] sm:$0xff]
        %v511 = vld [vmem:[%s1 + $0x1b0] sm:$0xff]
        %v512 = vld [vmem:[%s1 + $0x1b8] sm:$0xff]
        %v513 = vld [vmem:[%s1 + $0x1c0] sm:$0xff]
        %v514 = vld [vmem:[%s1 + $0x1c8] sm:$0xff]
        %v515 = vld [vmem:[%s1 + $0x1d0] sm:$0xff]
        %v516 = vld [vmem:[%s1 + $0x1d8] sm:$0xff]
        %v517 = vld [vmem:[%s1 + $0x1e0] sm:$0xff]
        %v518 = vld [vmem:[%s1 + $0x1e8] sm:$0xff]
        %v519 = vld [vmem:[%s1 + $0x1f0] sm:$0xff]
        %v520 = vld [vmem:[%s1 + $0x1f8] sm:$0xff]
        %v521 = vld [vmem:[%s1 + $0x200] sm:$0xff]
        %v522 = vld [vmem:[%s1 + $0x208] sm:$0xff]
        %v523 = vld [vmem:[%s1 + $0x210] sm:$0xff]
        %v524 = vld [vmem:[%s1 + $0x218] sm:$0xff]
        %v525 = vld [vmem:[%s1 + $0x220] sm:$0xff]
        %v526 = vld [vmem:[%s1 + $0x228] sm:$0xff]
        %v527 = vld [vmem:[%s1 + $0x230] sm:$0xff]
        %v528 = vld [vmem:[%s1 + $0x238] sm:$0xff]
        %v529 = vld [vmem:[%s1 + $0x240] sm:$0xff]
        %v530 = vld [vmem:[%s1 + $0x248] sm:$0xff]
        %v531 = vld [vmem:[%s1 + $0x250] sm:$0xff]
        %v532 = vld [vmem:[%s1 + $0x258] sm:$0xff]
        %v533 = vld [vmem:[%s1 + $0x260] sm:$0xff]
        %v534 = vld [vmem:[%s1 + $0x268] sm:$0xff]
        %v535 = vld [vmem:[%s1 + $0x270] sm:$0xff]
        %v536 = vld [vmem:[%s1 + $0x278] sm:$0xff]
        %v537 = vld [vmem:[%s1 + $0x280] sm:$0xff]
        %v538 = vld [vmem:[%s1 + $0x288] sm:$0xff]
        %v539 = vld [vmem:[%s1 + $0x290] sm:$0xff]
        %v540 = vld [vmem:[%s1 + $0x298] sm:$0xff]
        %v541 = vld [vmem:[%s1 + $0x2a0] sm:$0xff]
        %v542 = vld [vmem:[%s1 + $0x2a8] sm:$0xff]
        %v543 = vld [vmem:[%s1 + $0x2b0] sm:$0xff]
        %v544 = vld [vmem:[%s1 + $0x2b8] sm:$0xff]
        %v545 = vld [vmem:[%s1 + $0x2c0] sm:$0xff]
        %v546 = vld [vmem:[%s1 + $0x2c8] sm:$0xff]
        %v547 = vld [vmem:[%s1 + $0x2d0] sm:$0xff]
        %v548 = vld [vmem:[%s1 + $0x2d8] sm:$0xff]
        %v549 = vld [vmem:[%s1 + $0x2e0] sm:$0xff]
        %v550 = vld [vmem:[%s1 + $0x2e8] sm:$0xff]
        %v551 = vld [vmem:[%s1 + $0x2f0] sm:$0xff]
        %v552 = vld [vmem:[%s1 + $0x2f8] sm:$0xff]
        %v553 = vld [vmem:[%s1 + $0x300] sm:$0xff]
        %v554 = vld [vmem:[%s1 + $0x308] sm:$0xff]
        %v555 = vld [vmem:[%s1 + $0x310] sm:$0xff]
        %v556 = vld [vmem:[%s1 + $0x318] sm:$0xff]
        %v557 = vld [vmem:[%s1 + $0x320] sm:$0xff]
        %v558 = vld [vmem:[%s1 + $0x328] sm:$0xff]
        %v559 = vld [vmem:[%s1 + $0x330] sm:$0xff]
        %v560 = vld [vmem:[%s1 + $0x338] sm:$0xff]
        %v561 = vld [vmem:[%s1 + $0x340] sm:$0xff]
        %v562 = vld [vmem:[%s1 + $0x348] sm:$0xff]
        %v563 = vld [vmem:[%s1 + $0x350] sm:$0xff]
        %v564 = vld [vmem:[%s1 + $0x358] sm:$0xff]
        %v565 = vld [vmem:[%s1 + $0x360] sm:$0xff]
        %v566 = vld [vmem:[%s1 + $0x368] sm:$0xff]
        %v567 = vld [vmem:[%s1 + $0x370] sm:$0xff]
        %v568 = vld [vmem:[%s1 + $0x378] sm:$0xff]
        %v569 = vld [vmem:[%s1 + $0x380] sm:$0xff]
        %v570 = vld [vmem:[%s1 + $0x388] sm:$0xff]
        %v571 = vld [vmem:[%s1 + $0x390] sm:$0xff]
        %v572 = vld [vmem:[%s1 + $0x398] sm:$0xff]
        %v573 = vld [vmem:[%s1 + $0x3a0] sm:$0xff]
        %v574 = vld [vmem:[%s1 + $0x3a8] sm:$0xff]
        %v575 = vld [vmem:[%s1 + $0x3b0] sm:$0xff]
        %v576 = vld [vmem:[%s1 + $0x3b8] sm:$0xff]
        %v577 = vld [vmem:[%s1 + $0x3c0] sm:$0xff]
        %v578 = vld [vmem:[%s1 + $0x3c8] sm:$0xff]
        %v579 = vld [vmem:[%s1 + $0x3d0] sm:$0xff]
        %v580 = vld [vmem:[%s1 + $0x3d8] sm:$0xff]
        %v581 = vld [vmem:[%s1 + $0x3e0] sm:$0xff]
        %v582 = vld [vmem:[%s1 + $0x3e8] sm:$0xff]
        %v583 = vld [vmem:[%s1 + $0x3f0] sm:$0xff]
        %v584 = vld [vmem:[%s1 + $0x3f8] sm:$0xff]
        %585 = vmatpush.msra.mxu0 %v472
        %586 = vmatpush.msra.mxu0 %v471
        %587 = vmatpush.msra.mxu0 %v470
        %588 = vmatpush.msra.mxu0 %v469
        %589 = vmatpush.msra.mxu0 %v468
        %590 = vmatpush.msra.mxu0 %v467
        %591 = vmatpush.msra.mxu0 %v466
        %592 = vmatpush.msra.mxu0 %v465
        %593 = vmatpush.msra.mxu0 %v464
        %594 = vmatpush.msra.mxu0 %v463
        %595 = vmatpush.msra.mxu0 %v462
        %596 = vmatpush.msra.mxu0 %v461
        %597 = vmatpush.msra.mxu0 %v460
        %598 = vmatpush.msra.mxu0 %v459
        %599 = vmatpush.msra.mxu0 %v458
        %600 = vmatpush.msra.mxu0 %v457
        %601 = vmatmul.f32.gmra.mxu0 %v393
        %v602 = vpop.f32.mrf.mxu0
        %v603 = vadd.f32 0.0, %v602
        %604 = vmatmul.f32.gmra.mxu0 %v401
        %v605 = vpop.f32.mrf.mxu0
        %v606 = vadd.f32 0.0, %v605
        %607 = vmatmul.f32.gmra.mxu0 %v409
        %v608 = vpop.f32.mrf.mxu0
        %v609 = vadd.f32 0.0, %v608
        %610 = vmatmul.f32.gmra.mxu0 %v417
        %v611 = vpop.f32.mrf.mxu0
        %v612 = vadd.f32 0.0, %v611
        %613 = vmatmul.f32.gmra.mxu0 %v425
        %v614 = vpop.f32.mrf.mxu0
        %v615 = vadd.f32 0.0, %v614
        %616 = vmatmul.f32.gmra.mxu0 %v433
        %v617 = vpop.f32.mrf.mxu0
        %v618 = vadd.f32 0.0, %v617
        %619 = vmatmul.f32.gmra.mxu0 %v441
        %v620 = vpop.f32.mrf.mxu0
        %v621 = vadd.f32 0.0, %v620
        %622 = vmatmul.f32.gmra.mxu0 %v449
        %v623 = vpop.f32.mrf.mxu0
        %v624 = vadd.f32 0.0, %v623
        %625 = vdwg.mxu0
        %626 = vmatpush.msra.mxu0 %v488
        %627 = vmatpush.msra.mxu0 %v487
        %628 = vmatpush.msra.mxu0 %v486
        %629 = vmatpush.msra.mxu0 %v485
        %630 = vmatpush.msra.mxu0 %v484
        %631 = vmatpush.msra.mxu0 %v483
        %632 = vmatpush.msra.mxu0 %v482
        %633 = vmatpush.msra.mxu0 %v481
        %634 = vmatpush.msra.mxu0 %v480
        %635 = vmatpush.msra.mxu0 %v479
        %636 = vmatpush.msra.mxu0 %v478
        %637 = vmatpush.msra.mxu0 %v477
        %638 = vmatpush.msra.mxu0 %v476
        %639 = vmatpush.msra.mxu0 %v475
        %640 = vmatpush.msra.mxu0 %v474
        %641 = vmatpush.msra.mxu0 %v473
        %642 = vmatmul.f32.gmra.mxu0 %v394
        %v643 = vpop.f32.mrf.mxu0
        %v644 = vadd.f32 %v603, %v643
        %645 = vmatmul.f32.gmra.mxu0 %v402
        %v646 = vpop.f32.mrf.mxu0
        %v647 = vadd.f32 %v606, %v646
        %648 = vmatmul.f32.gmra.mxu0 %v410
        %v649 = vpop.f32.mrf.mxu0
        %v650 = vadd.f32 %v609, %v649
        %651 = vmatmul.f32.gmra.mxu0 %v418
        %v652 = vpop.f32.mrf.mxu0
        %v653 = vadd.f32 %v612, %v652
        %654 = vmatmul.f32.gmra.mxu0 %v426
        %v655 = vpop.f32.mrf.mxu0
        %v656 = vadd.f32 %v615, %v655
        %657 = vmatmul.f32.gmra.mxu0 %v434
        %v658 = vpop.f32.mrf.mxu0
        %v659 = vadd.f32 %v618, %v658
        %660 = vmatmul.f32.gmra.mxu0 %v442
        %v661 = vpop.f32.mrf.mxu0
        %v662 = vadd.f32 %v621, %v661
        %663 = vmatmul.f32.gmra.mxu0 %v450
        %v664 = vpop.f32.mrf.mxu0
        %v665 = vadd.f32 %v624, %v664
        %666 = vdwg.mxu0
        %667 = vmatpush.msra.mxu0 %v504
        %668 = vmatpush.msra.mxu0 %v503
        %669 = vmatpush.msra.mxu0 %v502
        %670 = vmatpush.msra.mxu0 %v501
        %671 = vmatpush.msra.mxu0 %v500
        %672 = vmatpush.msra.mxu0 %v499
        %673 = vmatpush.msra.mxu0 %v498
        %674 = vmatpush.msra.mxu0 %v497
        %675 = vmatpush.msra.mxu0 %v496
        %676 = vmatpush.msra.mxu0 %v495
        %677 = vmatpush.msra.mxu0 %v494
        %678 = vmatpush.msra.mxu0 %v493
        %679 = vmatpush.msra.mxu0 %v492
        %680 = vmatpush.msra.mxu0 %v491
        %681 = vmatpush.msra.mxu0 %v490
        %682 = vmatpush.msra.mxu0 %v489
        %683 = vmatmul.f32.gmra.mxu0 %v395
        %v684 = vpop.f32.mrf.mxu0
        %v685 = vadd.f32 %v644, %v684
        %686 = vmatmul.f32.gmra.mxu0 %v403
        %v687 = vpop.f32.mrf.mxu0
        %v688 = vadd.f32 %v647, %v687
        %689 = vmatmul.f32.gmra.mxu0 %v411
        %v690 = vpop.f32.mrf.mxu0
        %v691 = vadd.f32 %v650, %v690
        %692 = vmatmul.f32.gmra.mxu0 %v419
        %v693 = vpop.f32.mrf.mxu0
        %v694 = vadd.f32 %v653, %v693
        %695 = vmatmul.f32.gmra.mxu0 %v427
        %v696 = vpop.f32.mrf.mxu0
        %v697 = vadd.f32 %v656, %v696
        %698 = vmatmul.f32.gmra.mxu0 %v435
        %v699 = vpop.f32.mrf.mxu0
        %v700 = vadd.f32 %v659, %v699
        %701 = vmatmul.f32.gmra.mxu0 %v443
        %v702 = vpop.f32.mrf.mxu0
        %v703 = vadd.f32 %v662, %v702
        %704 = vmatmul.f32.gmra.mxu0 %v451
        %v705 = vpop.f32.mrf.mxu0
        %v706 = vadd.f32 %v665, %v705
        %707 = vdwg.mxu0
        %708 = vmatpush.msra.mxu0 %v520
        %709 = vmatpush.msra.mxu0 %v519
        %710 = vmatpush.msra.mxu0 %v518
        %711 = vmatpush.msra.mxu0 %v517
        %712 = vmatpush.msra.mxu0 %v516
        %713 = vmatpush.msra.mxu0 %v515
        %714 = vmatpush.msra.mxu0 %v514
        %715 = vmatpush.msra.mxu0 %v513
        %716 = vmatpush.msra.mxu0 %v512
        %717 = vmatpush.msra.mxu0 %v511
        %718 = vmatpush.msra.mxu0 %v510
        %719 = vmatpush.msra.mxu0 %v509
        %720 = vmatpush.msra.mxu0 %v508
        %721 = vmatpush.msra.mxu0 %v507
        %722 = vmatpush.msra.mxu0 %v506
        %723 = vmatpush.msra.mxu0 %v505
        %724 = vmatmul.f32.gmra.mxu0 %v396
        %v725 = vpop.f32.mrf.mxu0
        %v726 = vadd.f32 %v685, %v725
        %727 = vmatmul.f32.gmra.mxu0 %v404
        %v728 = vpop.f32.mrf.mxu0
        %v729 = vadd.f32 %v688, %v728
        %730 = vmatmul.f32.gmra.mxu0 %v412
        %v731 = vpop.f32.mrf.mxu0
        %v732 = vadd.f32 %v691, %v731
        %733 = vmatmul.f32.gmra.mxu0 %v420
        %v734 = vpop.f32.mrf.mxu0
        %v735 = vadd.f32 %v694, %v734
        %736 = vmatmul.f32.gmra.mxu0 %v428
        %v737 = vpop.f32.mrf.mxu0
        %v738 = vadd.f32 %v697, %v737
        %739 = vmatmul.f32.gmra.mxu0 %v436
        %v740 = vpop.f32.mrf.mxu0
        %v741 = vadd.f32 %v700, %v740
        %742 = vmatmul.f32.gmra.mxu0 %v444
        %v743 = vpop.f32.mrf.mxu0
        %v744 = vadd.f32 %v703, %v743
        %745 = vmatmul.f32.gmra.mxu0 %v452
        %v746 = vpop.f32.mrf.mxu0
        %v747 = vadd.f32 %v706, %v746
        %748 = vdwg.mxu0
        %749 = vmatpush.msra.mxu0 %v536
        %750 = vmatpush.msra.mxu0 %v535
        %751 = vmatpush.msra.mxu0 %v534
        %752 = vmatpush.msra.mxu0 %v533
        %753 = vmatpush.msra.mxu0 %v532
        %754 = vmatpush.msra.mxu0 %v531
        %755 = vmatpush.msra.mxu0 %v530
        %756 = vmatpush.msra.mxu0 %v529
        %757 = vmatpush.msra.mxu0 %v528
        %758 = vmatpush.msra.mxu0 %v527
        %759 = vmatpush.msra.mxu0 %v526
        %760 = vmatpush.msra.mxu0 %v525
        %761 = vmatpush.msra.mxu0 %v524
        %762 = vmatpush.msra.mxu0 %v523
        %763 = vmatpush.msra.mxu0 %v522
        %764 = vmatpush.msra.mxu0 %v521
        %765 = vmatmul.f32.gmra.mxu0 %v397
        %v766 = vpop.f32.mrf.mxu0
        %v767 = vadd.f32 %v726, %v766
        %768 = vmatmul.f32.gmra.mxu0 %v405
        %v769 = vpop.f32.mrf.mxu0
        %v770 = vadd.f32 %v729, %v769
        %771 = vmatmul.f32.gmra.mxu0 %v413
        %v772 = vpop.f32.mrf.mxu0
        %v773 = vadd.f32 %v732, %v772
        %774 = vmatmul.f32.gmra.mxu0 %v421
        %v775 = vpop.f32.mrf.mxu0
        %v776 = vadd.f32 %v735, %v775
        %777 = vmatmul.f32.gmra.mxu0 %v429
        %v778 = vpop.f32.mrf.mxu0
        %v779 = vadd.f32 %v738, %v778
        %780 = vmatmul.f32.gmra.mxu0 %v437
        %v781 = vpop.f32.mrf.mxu0
        %v782 = vadd.f32 %v741, %v781
        %783 = vmatmul.f32.gmra.mxu0 %v445
        %v784 = vpop.f32.mrf.mxu0
        %v785 = vadd.f32 %v744, %v784
        %786 = vmatmul.f32.gmra.mxu0 %v453
        %v787 = vpop.f32.mrf.mxu0
        %v788 = vadd.f32 %v747, %v787
        %789 = vdwg.mxu0
        %790 = vmatpush.msra.mxu0 %v552
        %791 = vmatpush.msra.mxu0 %v551
        %792 = vmatpush.msra.mxu0 %v550
        %793 = vmatpush.msra.mxu0 %v549
        %794 = vmatpush.msra.mxu0 %v548
        %795 = vmatpush.msra.mxu0 %v547
        %796 = vmatpush.msra.mxu0 %v546
        %797 = vmatpush.msra.mxu0 %v545
        %798 = vmatpush.msra.mxu0 %v544
        %799 = vmatpush.msra.mxu0 %v543
        %800 = vmatpush.msra.mxu0 %v542
        %801 = vmatpush.msra.mxu0 %v541
        %802 = vmatpush.msra.mxu0 %v540
        %803 = vmatpush.msra.mxu0 %v539
        %804 = vmatpush.msra.mxu0 %v538
        %805 = vmatpush.msra.mxu0 %v537
        %806 = vmatmul.f32.gmra.mxu0 %v398
        %v807 = vpop.f32.mrf.mxu0
        %v808 = vadd.f32 %v767, %v807
        %809 = vmatmul.f32.gmra.mxu0 %v406
        %v810 = vpop.f32.mrf.mxu0
        %v811 = vadd.f32 %v770, %v810
        %812 = vmatmul.f32.gmra.mxu0 %v414
        %v813 = vpop.f32.mrf.mxu0
        %v814 = vadd.f32 %v773, %v813
        %815 = vmatmul.f32.gmra.mxu0 %v422
        %v816 = vpop.f32.mrf.mxu0
        %v817 = vadd.f32 %v776, %v816
        %818 = vmatmul.f32.gmra.mxu0 %v430
        %v819 = vpop.f32.mrf.mxu0
        %v820 = vadd.f32 %v779, %v819
        %821 = vmatmul.f32.gmra.mxu0 %v438
        %v822 = vpop.f32.mrf.mxu0
        %v823 = vadd.f32 %v782, %v822
        %824 = vmatmul.f32.gmra.mxu0 %v446
        %v825 = vpop.f32.mrf.mxu0
        %v826 = vadd.f32 %v785, %v825
        %827 = vmatmul.f32.gmra.mxu0 %v454
        %v828 = vpop.f32.mrf.mxu0
        %v829 = vadd.f32 %v788, %v828
        %830 = vdwg.mxu0
        %831 = vmatpush.msra.mxu0 %v568
        %832 = vmatpush.msra.mxu0 %v567
        %833 = vmatpush.msra.mxu0 %v566
        %834 = vmatpush.msra.mxu0 %v565
        %835 = vmatpush.msra.mxu0 %v564
        %836 = vmatpush.msra.mxu0 %v563
        %837 = vmatpush.msra.mxu0 %v562
        %838 = vmatpush.msra.mxu0 %v561
        %839 = vmatpush.msra.mxu0 %v560
        %840 = vmatpush.msra.mxu0 %v559
        %841 = vmatpush.msra.mxu0 %v558
        %842 = vmatpush.msra.mxu0 %v557
        %843 = vmatpush.msra.mxu0 %v556
        %844 = vmatpush.msra.mxu0 %v555
        %845 = vmatpush.msra.mxu0 %v554
        %846 = vmatpush.msra.mxu0 %v553
        %847 = vmatmul.f32.gmra.mxu0 %v399
        %v848 = vpop.f32.mrf.mxu0
        %v849 = vadd.f32 %v808, %v848
        %850 = vmatmul.f32.gmra.mxu0 %v407
        %v851 = vpop.f32.mrf.mxu0
        %v852 = vadd.f32 %v811, %v851
        %853 = vmatmul.f32.gmra.mxu0 %v415
        %v854 = vpop.f32.mrf.mxu0
        %v855 = vadd.f32 %v814, %v854
        %856 = vmatmul.f32.gmra.mxu0 %v423
        %v857 = vpop.f32.mrf.mxu0
        %v858 = vadd.f32 %v817, %v857
        %859 = vmatmul.f32.gmra.mxu0 %v431
        %v860 = vpop.f32.mrf.mxu0
        %v861 = vadd.f32 %v820, %v860
        %862 = vmatmul.f32.gmra.mxu0 %v439
        %v863 = vpop.f32.mrf.mxu0
        %v864 = vadd.f32 %v823, %v863
        %865 = vmatmul.f32.gmra.mxu0 %v447
        %v866 = vpop.f32.mrf.mxu0
        %v867 = vadd.f32 %v826, %v866
        %868 = vmatmul.f32.gmra.mxu0 %v455
        %v869 = vpop.f32.mrf.mxu0
        %v870 = vadd.f32 %v829, %v869
        %871 = vdwg.mxu0
        %872 = vmatpush.msra.mxu0 %v584
        %873 = vmatpush.msra.mxu0 %v583
        %874 = vmatpush.msra.mxu0 %v582
        %875 = vmatpush.msra.mxu0 %v581
        %876 = vmatpush.msra.mxu0 %v580
        %877 = vmatpush.msra.mxu0 %v579
        %878 = vmatpush.msra.mxu0 %v578
        %879 = vmatpush.msra.mxu0 %v577
        %880 = vmatpush.msra.mxu0 %v576
        %881 = vmatpush.msra.mxu0 %v575
        %882 = vmatpush.msra.mxu0 %v574
        %883 = vmatpush.msra.mxu0 %v573
        %884 = vmatpush.msra.mxu0 %v572
        %885 = vmatpush.msra.mxu0 %v571
        %886 = vmatpush.msra.mxu0 %v570
        %887 = vmatpush.msra.mxu0 %v569
        %888 = vmatmul.f32.gmra.mxu0 %v400
        %v889 = vpop.f32.mrf.mxu0
        %v890 = vadd.f32 %v849, %v889
        %891 = vmatmul.f32.gmra.mxu0 %v408
        %v892 = vpop.f32.mrf.mxu0
        %v893 = vadd.f32 %v852, %v892
        %894 = vmatmul.f32.gmra.mxu0 %v416
        %v895 = vpop.f32.mrf.mxu0
        %v896 = vadd.f32 %v855, %v895
        %897 = vmatmul.f32.gmra.mxu0 %v424
        %v898 = vpop.f32.mrf.mxu0
        %v899 = vadd.f32 %v858, %v898
        %900 = vmatmul.f32.gmra.mxu0 %v432
        %v901 = vpop.f32.mrf.mxu0
        %v902 = vadd.f32 %v861, %v901
        %903 = vmatmul.f32.gmra.mxu0 %v440
        %v904 = vpop.f32.mrf.mxu0
        %v905 = vadd.f32 %v864, %v904
        %906 = vmatmul.f32.gmra.mxu0 %v448
        %v907 = vpop.f32.mrf.mxu0
        %v908 = vadd.f32 %v867, %v907
        %909 = vmatmul.f32.gmra.mxu0 %v456
        %v910 = vpop.f32.mrf.mxu0
        %v911 = vadd.f32 %v870, %v910
        %912 = vdwg.mxu0
        %v913 = vlog2.pop %v890
        %v914 = vmul.f32 %v913, 0.6931472
        %v915 = vlog2.pop %v893
        %v916 = vmul.f32 %v915, 0.6931472
        %v917 = vlog2.pop %v896
        %v918 = vmul.f32 %v917, 0.6931472
        %v919 = vlog2.pop %v899
        %v920 = vmul.f32 %v919, 0.6931472
        %v921 = vlog2.pop %v902
        %v922 = vmul.f32 %v921, 0.6931472
        %v923 = vlog2.pop %v905
        %v924 = vmul.f32 %v923, 0.6931472
        %v925 = vlog2.pop %v908
        %v926 = vmul.f32 %v925, 0.6931472
        %v927 = vlog2.pop %v911
        %v928 = vmul.f32 %v927, 0.6931472
        %v929 = vmul.f32 %v914, 0.33333334
        %v930 = vmul.f32 %v916, 0.33333334
        %v931 = vmul.f32 %v918, 0.33333334
        %v932 = vmul.f32 %v920, 0.33333334
        %v933 = vmul.f32 %v922, 0.33333334
        %v934 = vmul.f32 %v924, 0.33333334
        %v935 = vmul.f32 %v926, 0.33333334
        %v936 = vmul.f32 %v928, 0.33333334
        %v937 = vmul.f32 %v929, 1.442695
        %v938 = vpow.pop %v937
        %v939 = vmul.f32 %v930, 1.442695
        %v940 = vpow.pop %v939
        %v941 = vmul.f32 %v931, 1.442695
        %v942 = vpow.pop %v941
        %v943 = vmul.f32 %v932, 1.442695
        %v944 = vpow.pop %v943
        %v945 = vmul.f32 %v933, 1.442695
        %v946 = vpow.pop %v945
        %v947 = vmul.f32 %v934, 1.442695
        %v948 = vpow.pop %v947
        %v949 = vmul.f32 %v935, 1.442695
        %v950 = vpow.pop %v949
        %v951 = vmul.f32 %v936, 1.442695
        %v952 = vpow.pop %v951
        %953 = vst [vmem:[%s183] sm:$0xff] %v938
        %954 = vst [vmem:[%s183 + $0x8] sm:$0xff] %v940
        %955 = vst [vmem:[%s183 + $0x10] sm:$0xff] %v942
        %956 = vst [vmem:[%s183 + $0x18] sm:$0xff] %v944
        %957 = vst [vmem:[%s183 + $0x20] sm:$0xff] %v946
        %958 = vst [vmem:[%s183 + $0x28] sm:$0xff] %v948
        %959 = vst [vmem:[%s183 + $0x30] sm:$0xff] %v950
        %960 = vst [vmem:[%s183 + $0x38] sm:$0xff] %v952
        %s961 = sand.u32 %s98, 1
        %s962 = scalar_lea.sflag [#allocation3], %s961
        %s963 = sand.u32 %s98, 1
        %s964 = smul.addr %s963, 64
        %s965 = scalar_lea.vmem [#allocation2], %s964
        // Predicated region
        $region29: #{gem_pool1d.1} parent=27 // pred_check
          %p966 = pneg %p108
        $region30: #{gem_pool1d.1} parent=27 // pred_check_branch
          %968 = sbr.rel (%p966) target = $region32
        $region31: #{gem_pool1d.1} parent=27 // pred_region
          %s969 = smul.u32 8, %s22
          %971 = vsyncadd %s962, 0
          %s972 = sadd.s32 %s23, %s969
          %s973 = smul.addr %s21, 8
          %s974 = sadd.s32 %s972, %s973
          %s975 = smul.addr %s974, 8
          %s976 = scalar_lea.hbm %s2, %s975
          %s977 = sshll.u32 %s965, 4
          %s978 = int_to_ptr.vmem [resolvable:$true] %s977
          %s979 = sshll.u32 %s976, 4
          %s980 = int_to_ptr.hbm [resolvable:$true] %s979
          %985 = dma.vmem_to_hbm [thread:$0]  %s978, 1024, %s980, %s962, 128, 128, 8
        $region32: #{gem_pool1d.1} parent=27 // pred_fallthru
          _
      $region28: #{gem_pool1d.1} parent=5 // pred_fallthru
        _
      %p986 = scmp.le.s32.totalorder 2, %s11
      // Predicated region
      $region33: #{gem_pool1d.1} parent=5 // pred_check
        %p987 = pneg %p986
      $region34: #{gem_pool1d.1} parent=5 // pred_check_branch
        %989 = sbr.rel (%p987) target = $region36
      $region35: #{gem_pool1d.1} parent=5 // pred_region
        %s990 = ssub.s32 %s11, 2
        // Predicated region
        $region37: #{gem_pool1d.1} parent=35 // pred_check
          %p991 = pneg %p114
        $region38: #{gem_pool1d.1} parent=35 // pred_check_branch
          %993 = sbr.rel (%p991) target = $region40
        $region39: #{gem_pool1d.1} parent=35 // pred_region
          %s994 = sand.u32 %s99, 1
          %s995 = scalar_lea.sflag [#allocation3], %s994
          %s996 = sand.u32 %s99, 1
          %s997 = smul.addr %s996, 64
          %s998 = scalar_lea.vmem [#allocation2], %s997
          %1000 = dma.done %s995, 1024
        $region40: #{gem_pool1d.1} parent=35 // pred_fallthru
          _
      $region36: #{gem_pool1d.1} parent=5 // pred_fallthru
        _
    $region6: #{gem_pool1d.1} parent=1 // loop_footer
      %s15 = sadd.s32 1, %s11
    $region7: #{gem_pool1d.1} parent=1 // loop_footer_branch
      %10 = sbr.rel target = $region3
    $region8: #{gem_pool1d.1} parent=1 // loop_exit
      _
    %1001 = vsyncpa [#allocation3], 1
    %s1002 = scalar_lea.sflag [#allocation3], 1
    %1003 = vsyncpa %s1002, 1

</llo_original>
